<compile_context>
chip_gen: v6e
topology: v6e:2x2x1
jax: 0.10.0
libtpu: 0.0.40
codegen_flags: <defaults>
</compile_context>

<pallas_src>
import numpy as np
import jax
import jax.numpy as jnp
from jax.experimental import pallas as pl
from jax.experimental.pallas import tpu as pltpu


def _round_up(x, m):
    return ((x + m - 1) // m) * m


def _vmem_bytes(shape, itemsize=4):
    """Rough VMEM footprint of one block with (8,128) layout padding."""
    shape = tuple(int(s) for s in shape)
    if len(shape) == 1:
        return _round_up(shape[0] * itemsize, 512)
    lead = 1
    for s in shape[:-2]:
        lead *= s
    return lead * _round_up(shape[-2], 8) * _round_up(shape[-1], 128) * itemsize


def _make_encoder_kernel(T, tile_T, d_hidden, d_value, n_taps, copy_off, pad_off):
    """copy_off: scratch row where x[0] lands (multiple of 8 -> aligned copy).
       pad_off : scratch row of the *virtually padded* sequence element 0,
                 i.e. xpad[tau] lives at scratch row tau + pad_off."""
    d_hi = d_hidden
    d_iv = d_hidden + d_value

    def kernel(x_ref, w_ref, b_ref, shape_ref, inter_ref, extra_ref, xbuf):
        t_idx = pl.program_id(1)

        # Build the zero-padded input window once per batch element.  The time
        # grid axis is "arbitrary" (sequential), so the scratch carries across
        # the T tiles of this batch element.
        @pl.when(t_idx == 0)
        def _():
            xbuf[...] = jnp.zeros_like(xbuf)
            xbuf[copy_off:copy_off + T, :] = x_ref[0]

        t0 = pl.multiple_of(t_idx * tile_T, tile_T)

        # One fused accumulator for [shape | inter | extra]: one matmul per
        # global conv tap against the packed weight block.
        acc = jnp.dot(xbuf[pl.ds(t0 + pad_off, tile_T), :], w_ref[0],
                      preferred_element_type=jnp.float32)
        for g in range(1, n_taps):
            acc = acc + jnp.dot(xbuf[pl.ds(t0 + pad_off + g, tile_T), :],
                                w_ref[g], preferred_element_type=jnp.float32)
        acc = acc + b_ref[0]

        # Single store per output category (lane slices of one accumulator).
        shape_ref[0] = acc[:, :d_hi].astype(shape_ref.dtype)
        inter_ref[0] = acc[:, d_hi:d_iv].astype(inter_ref.dtype)
        extra_ref[0] = acc[:, d_iv:].astype(extra_ref.dtype)

    return kernel


def encoder_forward(data, feats, params, window_sizes, tile_t=None):
    if feats is not None:
        x = jnp.concatenate([data, feats], axis=2)
    else:
        x = data
    x = x.astype(jnp.float32)
    B, T, d_in = x.shape
    window_sizes = tuple(int(w) for w in window_sizes)
    max_w = max(window_sizes)
    L = max(w // 2 for w in window_sizes)
    R = max(w // 2 - (1 - w % 2) for w in window_sizes)
    n_taps = L + R + 1

    # ---- wrapper-side weight packing: windows + inter + extra into one block
    shape_ws = params["shape_weights"]          # list of [w_i, d_in, d_s_i]
    shape_bs = params["shape_biases"]           # list of [1, d_s_i]
    d_shapes = [int(w.shape[-1]) for w in shape_ws]
    d_hidden = sum(d_shapes)
    wi, bi = params["inter_weight"], params["inter_bias"]   # [d_in,dv],[1,dv]
    we, be = params["extra_weight"], params["extra_bias"]
    d_value = int(wi.shape[-1])
    d_total = d_hidden + 2 * d_value

    w_big = jnp.zeros((n_taps, d_in, d_total), jnp.float32)
    col = 0
    for i, w in enumerate(window_sizes):
        g0 = L - w // 2                          # global tap offset of tap k=0
        d_s = d_shapes[i]
        w_big = w_big.at[g0:g0 + w, :, col:col + d_s].set(
            shape_ws[i].astype(jnp.float32))
        col += d_s
    w_big = w_big.at[L, :, d_hidden:d_hidden + d_value].set(
        wi.astype(jnp.float32))                  # inter uses the center tap
    w_big = w_big.at[L, :, d_hidden + d_value:].set(we.astype(jnp.float32))
    b_big = jnp.concatenate(
        [b[0] for b in shape_bs] + [bi[0], be[0]]).astype(jnp.float32)[None, :]

    # ---- T tiling ----
    if tile_t is None:
        tile_t = T
        if T > 1024:
            for cand in (1024, 512, 256, 128):
                if T % cand == 0:
                    tile_t = cand
                    break
    assert T % tile_t == 0
    nT = T // tile_t

    # ---- in-kernel zero padding scratch layout ----
    copy_off = _round_up(L, 8)                   # aligned row for the x copy
    pad_off = copy_off - L                       # xpad[tau] -> row tau+pad_off
    buf_rows = copy_off + T + R

    kernel = _make_encoder_kernel(T, tile_t, d_hidden, d_value, n_taps,
                                  copy_off, pad_off)

    def const_spec(arr):
        nd = arr.ndim
        return pl.BlockSpec(arr.shape, lambda b, t, _nd=nd: (0,) * _nd)

    in_specs = [
        pl.BlockSpec((1, T, d_in), lambda b, t: (b, 0, 0)),   # constant over t
        const_spec(w_big),
        const_spec(b_big),
    ]
    out_shape = (
        jax.ShapeDtypeStruct((B, T, d_hidden), jnp.float32),
        jax.ShapeDtypeStruct((B, T, d_value), jnp.float32),
        jax.ShapeDtypeStruct((B, T, d_value), jnp.float32),   # extra, full T
    )
    out_specs = (
        pl.BlockSpec((1, tile_t, d_hidden), lambda b, t: (b, t, 0)),
        pl.BlockSpec((1, tile_t, d_value), lambda b, t: (b, t, 0)),
        pl.BlockSpec((1, tile_t, d_value), lambda b, t: (b, t, 0)),
    )
    scratch_shapes = [pltpu.VMEM((buf_rows, d_in), jnp.float32)]

    # Explicit scoped-VMEM budget: double-buffered padded blocks + scratch.
    est = sum(2 * _vmem_bytes(s) for s in
              [(1, T, d_in), w_big.shape, b_big.shape,
               (1, tile_t, d_hidden), (1, tile_t, d_value),
               (1, tile_t, d_value)])
    est += _vmem_bytes((buf_rows, d_in))
    vmem_limit = int(min(max(2 * est, 32 << 20), 56 << 20))

    fn = pl.pallas_call(
        kernel,
        out_shape=out_shape,
        grid_spec=pltpu.PrefetchScalarGridSpec(
            num_scalar_prefetch=0,
            grid=(B, nT),
            in_specs=in_specs,
            out_specs=out_specs,
            scratch_shapes=scratch_shapes,
        ),
        compiler_params=pltpu.CompilerParams(
            dimension_semantics=("parallel", "arbitrary"),
            vmem_limit_bytes=vmem_limit,
        ),
    )
    shape_out, inter_out, extra_full = fn(x, w_big, b_big)
    extra_out = extra_full[:, max_w:, :]         # cheap d_value-wide slice
    return shape_out, inter_out, extra_out


def init_params(key, d_data, d_feats, d_hidden, d_value, window_sizes,
                tie_casts=False):
    """Deterministic synthetic init mirroring the module's _reset_parameters
    (xavier_uniform weights, zero biases). Weights stored pre-transposed for
    channels-last matmuls."""
    d_in = d_data + d_feats
    n = len(window_sizes)
    assert n <= d_hidden
    d_shape = [d_hidden // n] * n
    d_shape[-1] += d_hidden % n
    keys = jax.random.split(key, n + 2)

    shape_weights, shape_biases = [], []
    for i, (d_s, w) in enumerate(zip(d_shape, window_sizes)):
        fan_in, fan_out = d_in * w, d_s * w
        bound = float(np.sqrt(6.0 / (fan_in + fan_out)))
        wt = jax.random.uniform(keys[i], (d_s, d_in, w), jnp.float32,
                                -bound, bound)                 # torch layout
        shape_weights.append(jnp.transpose(wt, (2, 1, 0)))     # [w, d_in, d_s]
        shape_biases.append(jnp.zeros((1, d_s), jnp.float32))

    def lin(k):
        bound = float(np.sqrt(6.0 / (d_in + d_value)))
        wt = jax.random.uniform(k, (d_value, d_in), jnp.float32, -bound, bound)
        return jnp.transpose(wt), jnp.zeros((1, d_value), jnp.float32)

    wi, bi = lin(keys[n])
    if tie_casts:
        we, be = wi, bi
    else:
        we, be = lin(keys[n + 1])

    return {
        "shape_weights": shape_weights,
        "shape_biases": shape_biases,
        "inter_weight": wi, "inter_bias": bi,
        "extra_weight": we, "extra_bias": be,
    }


def reference_forward(data, feats, params, window_sizes):
    """Pure-JAX reference mirroring the PyTorch forward."""
    x = jnp.concatenate([data, feats], axis=2) if feats is not None else data
    B, T, _ = x.shape
    shapes = []
    for i, w in enumerate(window_sizes):
        wt = params["shape_weights"][i]              # [w, d_in, d_s]
        l, r = w // 2, w // 2 - (1 - w % 2)
        xp = jnp.pad(x, ((0, 0), (l, r), (0, 0)))
        out = sum(jnp.einsum("btd,do->bto", xp[:, k:k + T, :], wt[k])
                  for k in range(w))
        shapes.append(out + params["shape_biases"][i][0])
    shape = jnp.concatenate(shapes, axis=2)
    inter = jnp.einsum("btd,do->bto", x, params["inter_weight"]) \
        + params["inter_bias"][0]
    extra = jnp.einsum("btd,do->bto", x[:, max(window_sizes):],
                       params["extra_weight"]) + params["extra_bias"][0]
    return shape, inter, extra


if __name__ == "__main__":
    B, T = 2, 16
    d_data, d_feats, d_hidden, d_value = 3, 1, 8, 4
    window_sizes = (3, 5)

    key = jax.random.PRNGKey(0)
    k_data, k_feats, k_params = jax.random.split(key, 3)
    data = jax.random.normal(k_data, (B, T, d_data), jnp.float32)
    feats = jax.random.normal(k_feats, (B, T, d_feats), jnp.float32)
    params = init_params(k_params, d_data, d_feats, d_hidden, d_value,
                         window_sizes, tie_casts=False)

    shape, inter, extra = encoder_forward(data, feats, params, window_sizes)
    jax.block_until_ready((shape, inter, extra))

    ref_shape, ref_inter, ref_extra = reference_forward(
        data, feats, params, window_sizes)
    np.testing.assert_allclose(np.asarray(shape), np.asarray(ref_shape),
                               rtol=1e-5, atol=1e-5)
    np.testing.assert_allclose(np.asarray(inter), np.asarray(ref_inter),
                               rtol=1e-5, atol=1e-5)
    np.testing.assert_allclose(np.asarray(extra), np.asarray(ref_extra),
                               rtol=1e-5, atol=1e-5)

    print("KERNEL_OK")
</pallas_src>

<mosaic_0001>
module attributes {stable_mosaic.version = 11 : i64} {
  func.func @kernel(%arg0: i32, %arg1: i32, %arg2: memref<1x16x4xf32, #tpu.memory_space<vmem>>, %arg3: memref<5x4x16xf32, #tpu.memory_space<vmem>>, %arg4: memref<1x16xf32, #tpu.memory_space<vmem>>, %arg5: memref<1x16x8xf32, #tpu.memory_space<vmem>>, %arg6: memref<1x16x4xf32, #tpu.memory_space<vmem>>, %arg7: memref<1x16x4xf32, #tpu.memory_space<vmem>>, %arg8: memref<26x4xf32, #tpu.memory_space<vmem>>) attributes {dimension_semantics = [#tpu.dimension_semantics<parallel>, #tpu.dimension_semantics<arbitrary>], iteration_bounds = array<i64: 2, 1>, scalar_prefetch = 0 : i64, scratch_operands = 1 : i64, tpu.core_type = #tpu.core_type<tc>, window_params = [{transform_indices = @transform_0, window_bounds = array<i64: 1, 16, 4>}, {pipeline_mode = #tpu.pipeline_mode<synchronous>, transform_indices = @transform_1, window_bounds = array<i64: 5, 4, 16>}, {pipeline_mode = #tpu.pipeline_mode<synchronous>, transform_indices = @transform_2, window_bounds = array<i64: 1, 16>}, {transform_indices = @transform_3, window_bounds = array<i64: 1, 16, 8>}, {transform_indices = @transform_4, window_bounds = array<i64: 1, 16, 4>}, {transform_indices = @transform_5, window_bounds = array<i64: 1, 16, 4>}]} {
    %c0_i32 = arith.constant 0 : i32
    %0 = arith.cmpi eq, %arg1, %c0_i32 : i32
    %1 = arith.extui %0 : i1 to i32
    %c0_i32_0 = arith.constant 0 : i32
    %2 = arith.cmpi ne, %1, %c0_i32_0 : i32
    scf.if %2 {
      %cst_35 = arith.constant 0.000000e+00 : f32
      %60 = vector.broadcast %cst_35 : f32 to vector<26x4xf32>
      %c0_36 = arith.constant 0 : index
      %c0_37 = arith.constant 0 : index
      %61 = vector.load %arg8[%c0_36, %c0_37] : memref<26x4xf32, #tpu.memory_space<vmem>>, vector<26x4xf32>
      tpu.vector_store %arg8[%c0_36, %c0_37], %60 {strides = array<i32>} : memref<26x4xf32, #tpu.memory_space<vmem>>, vector<26x4xf32>,
      %c0_38 = arith.constant 0 : index
      %c0_39 = arith.constant 0 : index
      %c0_40 = arith.constant 0 : index
      %62 = vector.load %arg2[%c0_38, %c0_39, %c0_40] : memref<1x16x4xf32, #tpu.memory_space<vmem>>, vector<1x16x4xf32>
      %63 = vector.shape_cast %62 : vector<1x16x4xf32> to vector<16x4xf32>
      %c8 = arith.constant 8 : index
      %c0_41 = arith.constant 0 : index
      %64 = vector.load %arg8[%c8, %c0_41] : memref<26x4xf32, #tpu.memory_space<vmem>>, vector<16x4xf32>
      tpu.vector_store %arg8[%c8, %c0_41], %63 {strides = array<i32>} : memref<26x4xf32, #tpu.memory_space<vmem>>, vector<16x4xf32>,
    } else {
    }
    %c16_i32 = arith.constant 16 : i32
    %3 = arith.muli %arg1, %c16_i32 : i32
    %4 = tpu.assume_multiple %3, 16 : i32
    %c6_i32 = arith.constant 6 : i32
    %5 = arith.addi %4, %c6_i32 : i32
    %6 = arith.index_cast %5 : i32 to index
    %c0 = arith.constant 0 : index
    %7 = vector.load %arg8[%6, %c0] : memref<26x4xf32, #tpu.memory_space<vmem>>, vector<16x4xf32>
    %c0_1 = arith.constant 0 : index
    %c0_2 = arith.constant 0 : index
    %c0_3 = arith.constant 0 : index
    %8 = vector.load %arg3[%c0_1, %c0_2, %c0_3] : memref<5x4x16xf32, #tpu.memory_space<vmem>>, vector<1x4x16xf32>
    %9 = vector.shape_cast %8 : vector<1x4x16xf32> to vector<4x16xf32>
    %cst = arith.constant dense<0.000000e+00> : vector<16x16xf32>
    %10 = tpu.matmul %7, %9, %cst {dimension_numbers = #tpu.dot_dimension_numbers<[1], [0], [0], [1], [0, 0, 1, 1], [], []>} : vector<16x4xf32>, vector<4x16xf32>, vector<16x16xf32> -> vector<16x16xf32>
    %c6_i32_4 = arith.constant 6 : i32
    %11 = arith.addi %4, %c6_i32_4 : i32
    %c1_i32 = arith.constant 1 : i32
    %12 = arith.addi %11, %c1_i32 : i32
    %13 = arith.index_cast %12 : i32 to index
    %c0_5 = arith.constant 0 : index
    %14 = vector.load %arg8[%13, %c0_5] : memref<26x4xf32, #tpu.memory_space<vmem>>, vector<16x4xf32>
    %c1 = arith.constant 1 : index
    %c0_6 = arith.constant 0 : index
    %c0_7 = arith.constant 0 : index
    %15 = vector.load %arg3[%c1, %c0_6, %c0_7] : memref<5x4x16xf32, #tpu.memory_space<vmem>>, vector<1x4x16xf32>
    %16 = vector.shape_cast %15 : vector<1x4x16xf32> to vector<4x16xf32>
    %cst_8 = arith.constant dense<0.000000e+00> : vector<16x16xf32>
    %17 = tpu.matmul %14, %16, %cst_8 {dimension_numbers = #tpu.dot_dimension_numbers<[1], [0], [0], [1], [0, 0, 1, 1], [], []>} : vector<16x4xf32>, vector<4x16xf32>, vector<16x16xf32> -> vector<16x16xf32>
    %18 = arith.addf %10, %17 : vector<16x16xf32>
    %c6_i32_9 = arith.constant 6 : i32
    %19 = arith.addi %4, %c6_i32_9 : i32
    %c2_i32 = arith.constant 2 : i32
    %20 = arith.addi %19, %c2_i32 : i32
    %21 = arith.index_cast %20 : i32 to index
    %c0_10 = arith.constant 0 : index
    %22 = vector.load %arg8[%21, %c0_10] : memref<26x4xf32, #tpu.memory_space<vmem>>, vector<16x4xf32>
    %c2 = arith.constant 2 : index
    %c0_11 = arith.constant 0 : index
    %c0_12 = arith.constant 0 : index
    %23 = vector.load %arg3[%c2, %c0_11, %c0_12] : memref<5x4x16xf32, #tpu.memory_space<vmem>>, vector<1x4x16xf32>
    %24 = vector.shape_cast %23 : vector<1x4x16xf32> to vector<4x16xf32>
    %cst_13 = arith.constant dense<0.000000e+00> : vector<16x16xf32>
    %25 = tpu.matmul %22, %24, %cst_13 {dimension_numbers = #tpu.dot_dimension_numbers<[1], [0], [0], [1], [0, 0, 1, 1], [], []>} : vector<16x4xf32>, vector<4x16xf32>, vector<16x16xf32> -> vector<16x16xf32>
    %26 = arith.addf %18, %25 : vector<16x16xf32>
    %c6_i32_14 = arith.constant 6 : i32
    %27 = arith.addi %4, %c6_i32_14 : i32
    %c3_i32 = arith.constant 3 : i32
    %28 = arith.addi %27, %c3_i32 : i32
    %29 = arith.index_cast %28 : i32 to index
    %c0_15 = arith.constant 0 : index
    %30 = vector.load %arg8[%29, %c0_15] : memref<26x4xf32, #tpu.memory_space<vmem>>, vector<16x4xf32>
    %c3 = arith.constant 3 : index
    %c0_16 = arith.constant 0 : index
    %c0_17 = arith.constant 0 : index
    %31 = vector.load %arg3[%c3, %c0_16, %c0_17] : memref<5x4x16xf32, #tpu.memory_space<vmem>>, vector<1x4x16xf32>
    %32 = vector.shape_cast %31 : vector<1x4x16xf32> to vector<4x16xf32>
    %cst_18 = arith.constant dense<0.000000e+00> : vector<16x16xf32>
    %33 = tpu.matmul %30, %32, %cst_18 {dimension_numbers = #tpu.dot_dimension_numbers<[1], [0], [0], [1], [0, 0, 1, 1], [], []>} : vector<16x4xf32>, vector<4x16xf32>, vector<16x16xf32> -> vector<16x16xf32>
    %34 = arith.addf %26, %33 : vector<16x16xf32>
    %c6_i32_19 = arith.constant 6 : i32
    %35 = arith.addi %4, %c6_i32_19 : i32
    %c4_i32 = arith.constant 4 : i32
    %36 = arith.addi %35, %c4_i32 : i32
    %37 = arith.index_cast %36 : i32 to index
    %c0_20 = arith.constant 0 : index
    %38 = vector.load %arg8[%37, %c0_20] : memref<26x4xf32, #tpu.memory_space<vmem>>, vector<16x4xf32>
    %c4 = arith.constant 4 : index
    %c0_21 = arith.constant 0 : index
    %c0_22 = arith.constant 0 : index
    %39 = vector.load %arg3[%c4, %c0_21, %c0_22] : memref<5x4x16xf32, #tpu.memory_space<vmem>>, vector<1x4x16xf32>
    %40 = vector.shape_cast %39 : vector<1x4x16xf32> to vector<4x16xf32>
    %cst_23 = arith.constant dense<0.000000e+00> : vector<16x16xf32>
    %41 = tpu.matmul %38, %40, %cst_23 {dimension_numbers = #tpu.dot_dimension_numbers<[1], [0], [0], [1], [0, 0, 1, 1], [], []>} : vector<16x4xf32>, vector<4x16xf32>, vector<16x16xf32> -> vector<16x16xf32>
    %42 = arith.addf %34, %41 : vector<16x16xf32>
    %c0_24 = arith.constant 0 : index
    %c0_25 = arith.constant 0 : index
    %43 = vector.load %arg4[%c0_24, %c0_25] : memref<1x16xf32, #tpu.memory_space<vmem>>, vector<1x16xf32>
    %44 = vector.shape_cast %43 : vector<1x16xf32> to vector<16xf32>
    %45 = vector.shape_cast %44 : vector<16xf32> to vector<1x16xf32>
    %46 = vector.broadcast %45 : vector<1x16xf32> to vector<16x16xf32>
    %47 = arith.addf %42, %46 : vector<16x16xf32>
    %48 = vector.extract_strided_slice %47 {offsets = [0, 0], sizes = [16, 8], strides = [1, 1]} : vector<16x16xf32> to vector<16x8xf32>
    %c0_26 = arith.constant 0 : index
    %c0_27 = arith.constant 0 : index
    %c0_28 = arith.constant 0 : index
    %49 = vector.load %arg5[%c0_26, %c0_27, %c0_28] : memref<1x16x8xf32, #tpu.memory_space<vmem>>, vector<1x16x8xf32>
    %50 = vector.shape_cast %49 : vector<1x16x8xf32> to vector<16x8xf32>
    %51 = vector.shape_cast %48 : vector<16x8xf32> to vector<1x16x8xf32>
    tpu.vector_store %arg5[%c0_26, %c0_27, %c0_28], %51 {strides = array<i32>} : memref<1x16x8xf32, #tpu.memory_space<vmem>>, vector<1x16x8xf32>,
    %52 = vector.extract_strided_slice %47 {offsets = [0, 8], sizes = [16, 4], strides = [1, 1]} : vector<16x16xf32> to vector<16x4xf32>
    %c0_29 = arith.constant 0 : index
    %c0_30 = arith.constant 0 : index
    %c0_31 = arith.constant 0 : index
    %53 = vector.load %arg6[%c0_29, %c0_30, %c0_31] : memref<1x16x4xf32, #tpu.memory_space<vmem>>, vector<1x16x4xf32>
    %54 = vector.shape_cast %53 : vector<1x16x4xf32> to vector<16x4xf32>
    %55 = vector.shape_cast %52 : vector<16x4xf32> to vector<1x16x4xf32>
    tpu.vector_store %arg6[%c0_29, %c0_30, %c0_31], %55 {strides = array<i32>} : memref<1x16x4xf32, #tpu.memory_space<vmem>>, vector<1x16x4xf32>,
    %56 = vector.extract_strided_slice %47 {offsets = [0, 12], sizes = [16, 4], strides = [1, 1]} : vector<16x16xf32> to vector<16x4xf32>
    %c0_32 = arith.constant 0 : index
    %c0_33 = arith.constant 0 : index
    %c0_34 = arith.constant 0 : index
    %57 = vector.load %arg7[%c0_32, %c0_33, %c0_34] : memref<1x16x4xf32, #tpu.memory_space<vmem>>, vector<1x16x4xf32>
    %58 = vector.shape_cast %57 : vector<1x16x4xf32> to vector<16x4xf32>
    %59 = vector.shape_cast %56 : vector<16x4xf32> to vector<1x16x4xf32>
    tpu.vector_store %arg7[%c0_32, %c0_33, %c0_34], %59 {strides = array<i32>} : memref<1x16x4xf32, #tpu.memory_space<vmem>>, vector<1x16x4xf32>,
    return
  }
  func.func @transform_0(%arg0: i32, %arg1: i32) -> (i32, i32, i32) {
    %c0_i32 = arith.constant 0 : i32
    %c0_i32_0 = arith.constant 0 : i32
    %c0_i32_1 = arith.constant 0 : i32
    return %arg0, %c0_i32, %c0_i32_0 : i32, i32, i32
  }
  func.func @transform_1(%arg0: i32, %arg1: i32) -> (i32, i32, i32) {
    %c0_i32 = arith.constant 0 : i32
    %c0_i32_0 = arith.constant 0 : i32
    %c0_i32_1 = arith.constant 0 : i32
    %c0_i32_2 = arith.constant 0 : i32
    return %c0_i32, %c0_i32_0, %c0_i32_1 : i32, i32, i32
  }
  func.func @transform_2(%arg0: i32, %arg1: i32) -> (i32, i32) {
    %c0_i32 = arith.constant 0 : i32
    %c0_i32_0 = arith.constant 0 : i32
    %c0_i32_1 = arith.constant 0 : i32
    return %c0_i32, %c0_i32_0 : i32, i32
  }
  func.func @transform_3(%arg0: i32, %arg1: i32) -> (i32, i32, i32) {
    %c0_i32 = arith.constant 0 : i32
    %c0_i32_0 = arith.constant 0 : i32
    return %arg0, %arg1, %c0_i32 : i32, i32, i32
  }
  func.func @transform_4(%arg0: i32, %arg1: i32) -> (i32, i32, i32) {
    %c0_i32 = arith.constant 0 : i32
    %c0_i32_0 = arith.constant 0 : i32
    return %arg0, %arg1, %c0_i32 : i32, i32, i32
  }
  func.func @transform_5(%arg0: i32, %arg1: i32) -> (i32, i32, i32) {
    %c0_i32 = arith.constant 0 : i32
    %c0_i32_0 = arith.constant 0 : i32
    return %arg0, %arg1, %c0_i32 : i32, i32, i32
  }
}

</mosaic_0001>

<llo_original>
// kernel: tpu_custom_call.1
$region0: #{tpu_custom_call.1}
  #allocation0 [shape = 'u32[]', space=smem, size = 0x4, offset = 0x4, fixed_abs, tag = 'smem constant byte address 0x4 - core index']
  #allocation1 [shape = 'u32[144,128]{1,0:T(1,128)}', space=vmem, size = 0x12000, scoped, tag = 'internal scratch']
  #allocation2 [shape = 'f32[26,4]{1,0:T(8,128)}', space=vmem, size = 0x4000, scoped, tag = 'scratch operand']
  %s0 = inlined_call_operand.vmem [shape: f32[2,16,4], index: 0, kind: input, shape index: {}]
  %s1 = inlined_call_operand.vmem [shape: f32[5,4,16], index: 1, kind: input, shape index: {}]
  %s2 = inlined_call_operand.vmem [shape: f32[1,16], index: 2, kind: input, shape index: {}]
  %s3 = inlined_call_operand.vmem [shape: f32[2,16,8], index: 3, kind: output, shape index: {0}]
  %s4 = inlined_call_operand.vmem [shape: f32[2,16,4], index: 4, kind: output, shape index: {1}]
  %s5 = inlined_call_operand.vmem [shape: f32[2,16,4], index: 5, kind: output, shape index: {2}]
  %6 = xla_tuple %s3, %s4, %s5
  %s7 = sld [smem:[#allocation0]]
  $region65: #{tpu_custom_call.1} parent=0
    _
  %s9 = ssub.s32 1, %s7
  %s10 = scalar_select 0, %s9, %s7
  loop: start=0, step=1, limit=4
  $region2: #{tpu_custom_call.1} parent=0 // loop_pre_header
    _
  $region3: #{tpu_custom_call.1} parent=0 // loop_header
    %s12 = sphi 0, %s16
    %p13 = scmp.ge.s32.totalorder %s12, 4
    %s19 = sphi 0, %s31
    %s20 = sphi 0, %s27
    %s21 = sphi 0, %s19
    %s22 = sphi 0, %s20
    %s23 = sphi 0, %s21
    %s24 = sphi 0, %s22
    %s34 = sphi 0, %s36
    %s37 = sphi 0, %s34
    %s38 = sphi 0, %s37
    %s54 = sphi 0, %s38
    %s58 = sphi 0, %s58
    %s60 = sphi 0, %s58
    %s61 = sphi 0, %s60
    %s75 = sphi 0, %s61
    %s79 = sphi 0, %s79
    %s81 = sphi 0, %s79
    %s82 = sphi 0, %s81
    %s96 = sphi 0, %s82
    %s104 = sphi 0, %s106
    %s107 = sphi 0, %s104
    %s108 = sphi 0, %s107
    %s124 = sphi 0, %s108
    %s132 = sphi 0, %s134
    %s135 = sphi 0, %s132
    %s136 = sphi 0, %s135
    %s152 = sphi 0, %s136
    %s160 = sphi 0, %s162
    %s163 = sphi 0, %s160
    %s164 = sphi 0, %s163
    %s180 = sphi 0, %s164
  $region4: #{tpu_custom_call.1} parent=0 // loop_header_branch
    %15 = sbr.rel (%p13) target = $region8
  $region5: #{tpu_custom_call.1} parent=0 // loop_body
    %s17 = ssub.s32 %s12, 1
    %s18 = ssub.s32 %s12, 2
    %s25 = sadd.s32 1, %s20
    %p26 = scmp.ge.s32.totalorder %s25, 1
    %s27 = scalar_select %p26, 0, %s25
    %s28 = sadd.s32 1, %s19
    %s29 = scalar_select %p26, %s28, %s19
    %p30 = scmp.ge.s32.totalorder %s29, 2
    %s31 = scalar_select %p30, 0, %s29
    %s32 = ssub.s32 %s19, %s31
    %p33 = scmp.eq.s32.totalorder %s32, 0
    %s35 = sadd.s32 %s34, 1
    %s36 = scalar_select %p33, %s34, %s35
    %p39 = pneg %p33
    %p40 = scmp.eq.s32.totalorder %s12, 1
    %p41 = por %p39, %p40
    %p42 = scmp.ne.s32.totalorder %s34, %s37
    %p43 = scmp.eq.s32.totalorder %s12, 0
    %p44 = por %p42, %p43
    %p45 = scmp.ne.s32.totalorder %s34, %s37
    %p46 = scmp.eq.s32.totalorder %s17, 1
    %p47 = por %p45, %p46
    %p48 = scmp.ne.s32.totalorder %s37, %s38
    %p49 = scmp.eq.s32.totalorder %s17, 0
    %p50 = por %p48, %p49
    %p51 = scmp.ne.s32.totalorder %s37, %s38
    %p52 = scmp.eq.s32.totalorder %s18, 1
    %p53 = por %p51, %p52
    %p55 = scmp.ne.s32.totalorder %s38, %s54
    %p56 = scmp.eq.s32.totalorder %s18, 0
    %p57 = por %p55, %p56
    %s59 = sadd.s32 %s58, 1
    %p62 = scmp.eq.s32.totalorder %s12, 1
    %p63 = scmp.ne.s32.totalorder %s58, %s60
    %p64 = scmp.eq.s32.totalorder %s12, 0
    %p65 = por %p63, %p64
    %p66 = scmp.ne.s32.totalorder %s58, %s60
    %p67 = scmp.eq.s32.totalorder %s17, 1
    %p68 = por %p66, %p67
    %p69 = scmp.ne.s32.totalorder %s60, %s61
    %p70 = scmp.eq.s32.totalorder %s17, 0
    %p71 = por %p69, %p70
    %p72 = scmp.ne.s32.totalorder %s60, %s61
    %p73 = scmp.eq.s32.totalorder %s18, 1
    %p74 = por %p72, %p73
    %p76 = scmp.ne.s32.totalorder %s61, %s75
    %p77 = scmp.eq.s32.totalorder %s18, 0
    %p78 = por %p76, %p77
    %s80 = sadd.s32 %s79, 1
    %p83 = scmp.eq.s32.totalorder %s12, 1
    %p84 = scmp.ne.s32.totalorder %s79, %s81
    %p85 = scmp.eq.s32.totalorder %s12, 0
    %p86 = por %p84, %p85
    %p87 = scmp.ne.s32.totalorder %s79, %s81
    %p88 = scmp.eq.s32.totalorder %s17, 1
    %p89 = por %p87, %p88
    %p90 = scmp.ne.s32.totalorder %s81, %s82
    %p91 = scmp.eq.s32.totalorder %s17, 0
    %p92 = por %p90, %p91
    %p93 = scmp.ne.s32.totalorder %s81, %s82
    %p94 = scmp.eq.s32.totalorder %s18, 1
    %p95 = por %p93, %p94
    %p97 = scmp.ne.s32.totalorder %s82, %s96
    %p98 = scmp.eq.s32.totalorder %s18, 0
    %p99 = por %p97, %p98
    %s100 = ssub.s32 %s19, %s31
    %s101 = ssub.s32 %s20, %s27
    %s102 = sor.u32 %s100, %s101
    %p103 = scmp.eq.s32.totalorder %s102, 0
    %s105 = sadd.s32 %s104, 1
    %s106 = scalar_select %p103, %s104, %s105
    %p109 = pneg %p103
    %p110 = scmp.eq.s32.totalorder %s12, 1
    %p111 = por %p109, %p110
    %p112 = scmp.ne.s32.totalorder %s104, %s107
    %p113 = scmp.eq.s32.totalorder %s12, 0
    %p114 = por %p112, %p113
    %p115 = scmp.ne.s32.totalorder %s104, %s107
    %p116 = scmp.eq.s32.totalorder %s17, 1
    %p117 = por %p115, %p116
    %p118 = scmp.ne.s32.totalorder %s107, %s108
    %p119 = scmp.eq.s32.totalorder %s17, 0
    %p120 = por %p118, %p119
    %p121 = scmp.ne.s32.totalorder %s107, %s108
    %p122 = scmp.eq.s32.totalorder %s18, 1
    %p123 = por %p121, %p122
    %p125 = scmp.ne.s32.totalorder %s108, %s124
    %p126 = scmp.eq.s32.totalorder %s18, 0
    %p127 = por %p125, %p126
    %s128 = ssub.s32 %s19, %s31
    %s129 = ssub.s32 %s20, %s27
    %s130 = sor.u32 %s128, %s129
    %p131 = scmp.eq.s32.totalorder %s130, 0
    %s133 = sadd.s32 %s132, 1
    %s134 = scalar_select %p131, %s132, %s133
    %p137 = pneg %p131
    %p138 = scmp.eq.s32.totalorder %s12, 1
    %p139 = por %p137, %p138
    %p140 = scmp.ne.s32.totalorder %s132, %s135
    %p141 = scmp.eq.s32.totalorder %s12, 0
    %p142 = por %p140, %p141
    %p143 = scmp.ne.s32.totalorder %s132, %s135
    %p144 = scmp.eq.s32.totalorder %s17, 1
    %p145 = por %p143, %p144
    %p146 = scmp.ne.s32.totalorder %s135, %s136
    %p147 = scmp.eq.s32.totalorder %s17, 0
    %p148 = por %p146, %p147
    %p149 = scmp.ne.s32.totalorder %s135, %s136
    %p150 = scmp.eq.s32.totalorder %s18, 1
    %p151 = por %p149, %p150
    %p153 = scmp.ne.s32.totalorder %s136, %s152
    %p154 = scmp.eq.s32.totalorder %s18, 0
    %p155 = por %p153, %p154
    %s156 = ssub.s32 %s19, %s31
    %s157 = ssub.s32 %s20, %s27
    %s158 = sor.u32 %s156, %s157
    %p159 = scmp.eq.s32.totalorder %s158, 0
    %s161 = sadd.s32 %s160, 1
    %s162 = scalar_select %p159, %s160, %s161
    %p165 = pneg %p159
    %p166 = scmp.eq.s32.totalorder %s12, 1
    %p167 = por %p165, %p166
    %p168 = scmp.ne.s32.totalorder %s160, %s163
    %p169 = scmp.eq.s32.totalorder %s12, 0
    %p170 = por %p168, %p169
    %p171 = scmp.ne.s32.totalorder %s160, %s163
    %p172 = scmp.eq.s32.totalorder %s17, 1
    %p173 = por %p171, %p172
    %p174 = scmp.ne.s32.totalorder %s163, %s164
    %p175 = scmp.eq.s32.totalorder %s17, 0
    %p176 = por %p174, %p175
    %p177 = scmp.ne.s32.totalorder %s163, %s164
    %p178 = scmp.eq.s32.totalorder %s18, 1
    %p179 = por %p177, %p178
    %p181 = scmp.ne.s32.totalorder %s164, %s180
    %p182 = scmp.eq.s32.totalorder %s18, 0
    %p183 = por %p181, %p182
    %p184 = scmp.le.s32.totalorder 1, %s12
    %p185 = scmp.lt.s32.totalorder %s12, 3
    %p186 = pnand %p184, %p185
    %p187 = pneg %p186
    // Predicated region
    $region9: #{tpu_custom_call.1} parent=5 // pred_check
      _
    $region10: #{tpu_custom_call.1} parent=5 // pred_check_branch
      %189 = sbr.rel (%p186) target = $region12
    $region11: #{tpu_custom_call.1} parent=5 // pred_region
      %s190 = ssub.s32 %s12, 1
      // Predicated region
      $region13: #{tpu_custom_call.1} parent=11 // pred_check
        %p191 = pneg %p71
      $region14: #{tpu_custom_call.1} parent=11 // pred_check_branch
        %193 = sbr.rel (%p191) target = $region16
      $region15: #{tpu_custom_call.1} parent=11 // pred_region
        _
      $region16: #{tpu_custom_call.1} parent=11 // pred_fallthru
        _
      // Predicated region
      $region17: #{tpu_custom_call.1} parent=11 // pred_check
        %p194 = pneg %p92
      $region18: #{tpu_custom_call.1} parent=11 // pred_check_branch
        %196 = sbr.rel (%p194) target = $region20
      $region19: #{tpu_custom_call.1} parent=11 // pred_region
        _
      $region20: #{tpu_custom_call.1} parent=11 // pred_fallthru
        _
    $region12: #{tpu_custom_call.1} parent=5 // pred_fallthru
      _
    %p197 = scmp.lt.s32.totalorder %s12, 2
    // Predicated region
    $region21: #{tpu_custom_call.1} parent=5 // pred_check
      %p198 = pneg %p197
    $region22: #{tpu_custom_call.1} parent=5 // pred_check_branch
      %200 = sbr.rel (%p198) target = $region24
    $region23: #{tpu_custom_call.1} parent=5 // pred_region
      // Predicated region
      $region25: #{tpu_custom_call.1} parent=23 // pred_check
        %p201 = pneg %p44
      $region26: #{tpu_custom_call.1} parent=23 // pred_check_branch
        %203 = sbr.rel (%p201) target = $region28
      $region27: #{tpu_custom_call.1} parent=23 // pred_region
        %p204 = scmp.lt.s32.totalorder %s19, 1
        %s205 = scalar_select %p204, %s19, 1
        %s206 = smul.addr %s205, 2
        %s207 = smul.addr %s206, 8
        %s208 = scalar_lea.vmem %s0, %s207
      $region28: #{tpu_custom_call.1} parent=23 // pred_fallthru
        _
    $region24: #{tpu_custom_call.1} parent=5 // pred_fallthru
      _
    %p209 = scmp.le.s32.totalorder 1, %s12
    %p210 = scmp.lt.s32.totalorder %s12, 3
    %p211 = pnand %p209, %p210
    %p212 = pneg %p211
    // Predicated region
    $region29: #{tpu_custom_call.1} parent=5 // pred_check
      _
    $region30: #{tpu_custom_call.1} parent=5 // pred_check_branch
      %214 = sbr.rel (%p211) target = $region32
    $region31: #{tpu_custom_call.1} parent=5 // pred_region
      %s215 = ssub.s32 %s12, 1
      %p216 = scmp.lt.s32.totalorder %s21, 1
      %s217 = scalar_select %p216, %s21, 1
      %s218 = smul.addr %s217, 2
      %s219 = smul.addr %s218, 8
      %s220 = scalar_lea.vmem %s0, %s219
      %p221 = pneg %p50
      %p222 = pneg %p47
      %p223 = pneg %p71
      %p224 = pneg %p68
      %p225 = pneg %p92
      %p226 = pneg %p89
      %p227 = pneg %p120
      %p228 = pneg %p117
      %s229 = smul.u32 2, %s22
      %p230 = scmp.lt.s32.totalorder %s21, 1
      %s231 = scalar_select %p230, %s21, 1
      %p232 = scmp.lt.s32.totalorder %s229, 1
      %s233 = scalar_select %p232, %s229, 1
      %s234 = smul.addr %s231, 2
      %s235 = sadd.s32 %s233, %s234
      %s236 = smul.addr %s235, 8
      %s237 = scalar_lea.vmem %s3, %s236
      %p238 = pneg %p148
      %p239 = pneg %p145
      %s240 = smul.u32 2, %s22
      %p241 = scmp.lt.s32.totalorder %s21, 1
      %s242 = scalar_select %p241, %s21, 1
      %p243 = scmp.lt.s32.totalorder %s240, 1
      %s244 = scalar_select %p243, %s240, 1
      %s245 = smul.addr %s242, 2
      %s246 = sadd.s32 %s244, %s245
      %s247 = smul.addr %s246, 8
      %s248 = scalar_lea.vmem %s4, %s247
      %p249 = pneg %p176
      %p250 = pneg %p173
      %s251 = smul.u32 2, %s22
      %p252 = scmp.lt.s32.totalorder %s21, 1
      %s253 = scalar_select %p252, %s21, 1
      %p254 = scmp.lt.s32.totalorder %s251, 1
      %s255 = scalar_select %p254, %s251, 1
      %s256 = smul.addr %s253, 2
      %s257 = sadd.s32 %s255, %s256
      %s258 = smul.addr %s257, 8
      %s259 = scalar_lea.vmem %s5, %s258
      %p260 = scmp.lt.s32.totalorder %s21, 1
      %s261 = scalar_select %p260, %s21, 1
      %s262 = smul.addr %s261, 2
      %s263 = smul.addr %s262, 8
      %s264 = scalar_lea.vmem %s0, %s263
      %s265 = smul.u32 2, %s22
      %p266 = scmp.lt.s32.totalorder %s21, 1
      %s267 = scalar_select %p266, %s21, 1
      %p268 = scmp.lt.s32.totalorder %s265, 1
      %s269 = scalar_select %p268, %s265, 1
      %s270 = smul.addr %s267, 2
      %s271 = sadd.s32 %s269, %s270
      %s272 = smul.addr %s271, 8
      %s273 = scalar_lea.vmem %s3, %s272
      %s274 = smul.u32 2, %s22
      %s275 = smul.u32 2, %s22
      %p276 = scmp.lt.s32.totalorder %s21, 1
      %s277 = scalar_select %p276, %s21, 1
      %p278 = scmp.lt.s32.totalorder %s275, 1
      %s279 = scalar_select %p278, %s275, 1
      %s280 = smul.addr %s277, 2
      %s281 = sadd.s32 %s279, %s280
      %s282 = smul.addr %s281, 8
      %s283 = scalar_lea.vmem %s4, %s282
      %s284 = smul.u32 2, %s22
      %s285 = smul.u32 2, %s22
      %p286 = scmp.lt.s32.totalorder %s21, 1
      %s287 = scalar_select %p286, %s21, 1
      %p288 = scmp.lt.s32.totalorder %s285, 1
      %s289 = scalar_select %p288, %s285, 1
      %s290 = smul.addr %s287, 2
      %s291 = sadd.s32 %s289, %s290
      %s292 = smul.addr %s291, 8
      %s293 = scalar_lea.vmem %s5, %s292
      %s294 = smul.u32 2, %s22
      %p295 = scmp.eq.s32.totalorder %s22, 0
      // Predicated region
      $region33: #{tpu_custom_call.1} parent=31 // pred_check
        %p296 = pneg %p295
      $region34: #{tpu_custom_call.1} parent=31 // pred_check_branch
        %298 = sbr.rel (%p296) target = $region36
      $region35: #{tpu_custom_call.1} parent=31 // pred_region
        %vm299 = vcmask 31744
        %300 = vst.msk [vmem:[#allocation2] sm:$0xff] %vm299, 0.0
        %301 = vst.msk [vmem:[#allocation2 + $0x8] sm:$0xff] %vm299, 0.0
        %302 = vst.msk [vmem:[#allocation2 + $0x10] sm:$0xff] %vm299, 0.0
        %vm303 = vcmask 25600
        %304 = vst.msk [vmem:[#allocation2 + $0x18] sm:$0x3] %vm303, 0.0
        %v305 = vld [vmem:[%s264] sm:$0xff]
        %v306 = vld [vmem:[%s264 + $0x8] sm:$0xff]
        %307 = vst.msk [vmem:[#allocation2 + $0x8] sm:$0xff] %vm299, %v305
        %308 = vst.msk [vmem:[#allocation2 + $0x10] sm:$0xff] %vm299, %v306
      $region36: #{tpu_custom_call.1} parent=31 // pred_fallthru
        _
      %s309 = smul.u32 %s22, 16
      %s310 = sadd.s32 %s309, 6
      %s311 = scalar_lea.vmem [#allocation2], %s310
      %v312 = vld [vmem:[%s311] sm:$0xff]
      %v313 = vld [vmem:[%s311 + $0x8] sm:$0xff]
      %v314 = vld [vmem:[%s1] sm:$0xf]
      %s315 = sadd.s32 %s309, 7
      %s316 = scalar_lea.vmem [#allocation2], %s315
      %v317 = vld [vmem:[%s316] sm:$0xff]
      %v318 = vld [vmem:[%s316 + $0x8] sm:$0xff]
      %s319 = scalar_lea.vmem %s1, 4
      %v320 = vld [vmem:[%s319] sm:$0xf]
      %vm321 = vcmask 31744
      %v323 = vsel %vm321, %v317, 0
      %v326 = vsel %vm321, %v318, 0
      %vm328 = vcmask 1043456
      %v330 = vsel %vm328, %v320, 0
      %332 = vmatprep.subr.mxu0 0.0
      %333 = vmatpush1.msra.mxu0 0.0
      %334 = vmatprep.subr.mxu0 0.0
      %335 = vmatpush1.msra.mxu0 0.0
      %336 = vmatprep.subr.mxu0 0.0
      %337 = vmatpush1.msra.mxu0 0.0
      %338 = vmatprep.subr.mxu0 0.0
      %339 = vmatpush1.msra.mxu0 0.0
      %340 = vmatprep.subr.mxu0 0.0
      %341 = vmatpush1.msra.mxu0 0.0
      %342 = vmatprep.subr.mxu0 0.0
      %343 = vmatpush1.msra.mxu0 0.0
      %344 = vmatprep.subr.mxu0 0.0
      %345 = vmatpush1.msra.mxu0 0.0
      %346 = vmatprep.subr.mxu0 0.0
      %347 = vmatpush1.msra.mxu0 0.0
      %348 = vmatprep.subr.mxu0 0.0
      %349 = vmatpush1.msra.mxu0 0.0
      %350 = vmatprep.subr.mxu0 0.0
      %351 = vmatpush1.msra.mxu0 0.0
      %352 = vmatprep.subr.mxu0 0.0
      %353 = vmatpush1.msra.mxu0 0.0
      %354 = vmatprep.subr.mxu0 0.0
      %355 = vmatpush1.msra.mxu0 0.0
      %356 = vmatprep.subr.mxu0 0.0
      %357 = vmatpush1.msra.mxu0 0.0
      %358 = vmatprep.subr.mxu0 0.0
      %359 = vmatpush1.msra.mxu0 0.0
      %360 = vmatprep.subr.mxu0 0.0
      %361 = vmatpush1.msra.mxu0 0.0
      %362 = vmatprep.subr.mxu0 0.0
      %363 = vmatpush1.msra.mxu0 %v330
      %364 = vmatprep.subr.mxu0 0.0
      %365 = vmatpush2.msra.mxu0 0.0
      %366 = vmatprep.subr.mxu0 0.0
      %367 = vmatpush2.msra.mxu0 0.0
      %368 = vmatprep.subr.mxu0 0.0
      %369 = vmatpush2.msra.mxu0 0.0
      %370 = vmatprep.subr.mxu0 0.0
      %371 = vmatpush2.msra.mxu0 0.0
      %372 = vmatprep.subr.mxu0 0.0
      %373 = vmatpush2.msra.mxu0 0.0
      %374 = vmatprep.subr.mxu0 0.0
      %375 = vmatpush2.msra.mxu0 0.0
      %376 = vmatprep.subr.mxu0 0.0
      %377 = vmatpush2.msra.mxu0 0.0
      %378 = vmatprep.subr.mxu0 0.0
      %379 = vmatpush2.msra.mxu0 0.0
      %380 = vmatprep.subr.mxu0 0.0
      %381 = vmatpush2.msra.mxu0 0.0
      %382 = vmatprep.subr.mxu0 0.0
      %383 = vmatpush2.msra.mxu0 0.0
      %384 = vmatprep.subr.mxu0 0.0
      %385 = vmatpush2.msra.mxu0 0.0
      %386 = vmatprep.subr.mxu0 0.0
      %387 = vmatpush2.msra.mxu0 0.0
      %388 = vmatprep.subr.mxu0 0.0
      %389 = vmatpush2.msra.mxu0 0.0
      %390 = vmatprep.subr.mxu0 0.0
      %391 = vmatpush2.msra.mxu0 0.0
      %392 = vmatprep.subr.mxu0 0.0
      %393 = vmatpush2.msra.mxu0 0.0
      %394 = vmatprep.subr.mxu0 0.0
      %395 = vmatpush2.msra.mxu0 0.0
      %396 = vmatprep.mubr.f32.mxu0 0.0
      %397 = vmatmul.mubr.f32.gmra.mxu0 %v323
      %v398 = vpop.f32.mrf.mxu0
      %v399 = vadd.f32 0.0, %v398
      %v400 = vpop.f32.mrf.mxu0
      %401 = vmatprep.mubr.f32.mxu0 0.0
      %402 = vmatmul.mubr.f32.gmra.mxu0 %v326
      %v403 = vpop.f32.mrf.mxu0
      %v404 = vadd.f32 0.0, %v403
      %v405 = vpop.f32.mrf.mxu0
      %406 = vdwg.mxu0
      %v408 = vsel %vm321, %v312, 0
      %v411 = vsel %vm321, %v313, 0
      %v414 = vsel %vm328, %v314, 0
      %416 = vmatprep.subr.mxu0 0.0
      %417 = vmatpush1.msra.mxu0 0.0
      %418 = vmatprep.subr.mxu0 0.0
      %419 = vmatpush1.msra.mxu0 0.0
      %420 = vmatprep.subr.mxu0 0.0
      %421 = vmatpush1.msra.mxu0 0.0
      %422 = vmatprep.subr.mxu0 0.0
      %423 = vmatpush1.msra.mxu0 0.0
      %424 = vmatprep.subr.mxu0 0.0
      %425 = vmatpush1.msra.mxu0 0.0
      %426 = vmatprep.subr.mxu0 0.0
      %427 = vmatpush1.msra.mxu0 0.0
      %428 = vmatprep.subr.mxu0 0.0
      %429 = vmatpush1.msra.mxu0 0.0
      %430 = vmatprep.subr.mxu0 0.0
      %431 = vmatpush1.msra.mxu0 0.0
      %432 = vmatprep.subr.mxu0 0.0
      %433 = vmatpush1.msra.mxu0 0.0
      %434 = vmatprep.subr.mxu0 0.0
      %435 = vmatpush1.msra.mxu0 0.0
      %436 = vmatprep.subr.mxu0 0.0
      %437 = vmatpush1.msra.mxu0 0.0
      %438 = vmatprep.subr.mxu0 0.0
      %439 = vmatpush1.msra.mxu0 0.0
      %440 = vmatprep.subr.mxu0 0.0
      %441 = vmatpush1.msra.mxu0 0.0
      %442 = vmatprep.subr.mxu0 0.0
      %443 = vmatpush1.msra.mxu0 0.0
      %444 = vmatprep.subr.mxu0 0.0
      %445 = vmatpush1.msra.mxu0 0.0
      %446 = vmatprep.subr.mxu0 0.0
      %447 = vmatpush1.msra.mxu0 %v414
      %448 = vmatprep.subr.mxu0 0.0
      %449 = vmatpush2.msra.mxu0 0.0
      %450 = vmatprep.subr.mxu0 0.0
      %451 = vmatpush2.msra.mxu0 0.0
      %452 = vmatprep.subr.mxu0 0.0
      %453 = vmatpush2.msra.mxu0 0.0
      %454 = vmatprep.subr.mxu0 0.0
      %455 = vmatpush2.msra.mxu0 0.0
      %456 = vmatprep.subr.mxu0 0.0
      %457 = vmatpush2.msra.mxu0 0.0
      %458 = vmatprep.subr.mxu0 0.0
      %459 = vmatpush2.msra.mxu0 0.0
      %460 = vmatprep.subr.mxu0 0.0
      %461 = vmatpush2.msra.mxu0 0.0
      %462 = vmatprep.subr.mxu0 0.0
      %463 = vmatpush2.msra.mxu0 0.0
      %464 = vmatprep.subr.mxu0 0.0
      %465 = vmatpush2.msra.mxu0 0.0
      %466 = vmatprep.subr.mxu0 0.0
      %467 = vmatpush2.msra.mxu0 0.0
      %468 = vmatprep.subr.mxu0 0.0
      %469 = vmatpush2.msra.mxu0 0.0
      %470 = vmatprep.subr.mxu0 0.0
      %471 = vmatpush2.msra.mxu0 0.0
      %472 = vmatprep.subr.mxu0 0.0
      %473 = vmatpush2.msra.mxu0 0.0
      %474 = vmatprep.subr.mxu0 0.0
      %475 = vmatpush2.msra.mxu0 0.0
      %476 = vmatprep.subr.mxu0 0.0
      %477 = vmatpush2.msra.mxu0 0.0
      %478 = vmatprep.subr.mxu0 0.0
      %479 = vmatpush2.msra.mxu0 0.0
      %480 = vmatprep.mubr.f32.mxu0 0.0
      %481 = vmatmul.mubr.f32.gmra.mxu0 %v408
      %v482 = vpop.f32.mrf.mxu0
      %v483 = vadd.f32 %v399, %v482
      %v484 = vpop.f32.mrf.mxu0
      %485 = vmatprep.mubr.f32.mxu0 0.0
      %486 = vmatmul.mubr.f32.gmra.mxu0 %v411
      %v487 = vpop.f32.mrf.mxu0
      %v488 = vadd.f32 %v404, %v487
      %v489 = vpop.f32.mrf.mxu0
      %490 = vdwg.mxu0
      %s491 = sadd.s32 %s309, 8
      %s492 = scalar_lea.vmem [#allocation2], %s491
      %v493 = vld [vmem:[%s492] sm:$0xff]
      %v494 = vld [vmem:[%s492 + $0x8] sm:$0xff]
      %s495 = scalar_lea.vmem %s1, 8
      %v496 = vld [vmem:[%s495] sm:$0xf]
      %v498 = vsel %vm321, %v493, 0
      %v501 = vsel %vm321, %v494, 0
      %v504 = vsel %vm328, %v496, 0
      %506 = vmatprep.subr.mxu0 0.0
      %507 = vmatpush1.msra.mxu0 0.0
      %508 = vmatprep.subr.mxu0 0.0
      %509 = vmatpush1.msra.mxu0 0.0
      %510 = vmatprep.subr.mxu0 0.0
      %511 = vmatpush1.msra.mxu0 0.0
      %512 = vmatprep.subr.mxu0 0.0
      %513 = vmatpush1.msra.mxu0 0.0
      %514 = vmatprep.subr.mxu0 0.0
      %515 = vmatpush1.msra.mxu0 0.0
      %516 = vmatprep.subr.mxu0 0.0
      %517 = vmatpush1.msra.mxu0 0.0
      %518 = vmatprep.subr.mxu0 0.0
      %519 = vmatpush1.msra.mxu0 0.0
      %520 = vmatprep.subr.mxu0 0.0
      %521 = vmatpush1.msra.mxu0 0.0
      %522 = vmatprep.subr.mxu0 0.0
      %523 = vmatpush1.msra.mxu0 0.0
      %524 = vmatprep.subr.mxu0 0.0
      %525 = vmatpush1.msra.mxu0 0.0
      %526 = vmatprep.subr.mxu0 0.0
      %527 = vmatpush1.msra.mxu0 0.0
      %528 = vmatprep.subr.mxu0 0.0
      %529 = vmatpush1.msra.mxu0 0.0
      %530 = vmatprep.subr.mxu0 0.0
      %531 = vmatpush1.msra.mxu0 0.0
      %532 = vmatprep.subr.mxu0 0.0
      %533 = vmatpush1.msra.mxu0 0.0
      %534 = vmatprep.subr.mxu0 0.0
      %535 = vmatpush1.msra.mxu0 0.0
      %536 = vmatprep.subr.mxu0 0.0
      %537 = vmatpush1.msra.mxu0 %v504
      %538 = vmatprep.subr.mxu0 0.0
      %539 = vmatpush2.msra.mxu0 0.0
      %540 = vmatprep.subr.mxu0 0.0
      %541 = vmatpush2.msra.mxu0 0.0
      %542 = vmatprep.subr.mxu0 0.0
      %543 = vmatpush2.msra.mxu0 0.0
      %544 = vmatprep.subr.mxu0 0.0
      %545 = vmatpush2.msra.mxu0 0.0
      %546 = vmatprep.subr.mxu0 0.0
      %547 = vmatpush2.msra.mxu0 0.0
      %548 = vmatprep.subr.mxu0 0.0
      %549 = vmatpush2.msra.mxu0 0.0
      %550 = vmatprep.subr.mxu0 0.0
      %551 = vmatpush2.msra.mxu0 0.0
      %552 = vmatprep.subr.mxu0 0.0
      %553 = vmatpush2.msra.mxu0 0.0
      %554 = vmatprep.subr.mxu0 0.0
      %555 = vmatpush2.msra.mxu0 0.0
      %556 = vmatprep.subr.mxu0 0.0
      %557 = vmatpush2.msra.mxu0 0.0
      %558 = vmatprep.subr.mxu0 0.0
      %559 = vmatpush2.msra.mxu0 0.0
      %560 = vmatprep.subr.mxu0 0.0
      %561 = vmatpush2.msra.mxu0 0.0
      %562 = vmatprep.subr.mxu0 0.0
      %563 = vmatpush2.msra.mxu0 0.0
      %564 = vmatprep.subr.mxu0 0.0
      %565 = vmatpush2.msra.mxu0 0.0
      %566 = vmatprep.subr.mxu0 0.0
      %567 = vmatpush2.msra.mxu0 0.0
      %568 = vmatprep.subr.mxu0 0.0
      %569 = vmatpush2.msra.mxu0 0.0
      %570 = vmatprep.mubr.f32.mxu0 0.0
      %571 = vmatmul.mubr.f32.gmra.mxu0 %v498
      %v572 = vpop.f32.mrf.mxu0
      %v573 = vadd.f32 0.0, %v572
      %v574 = vpop.f32.mrf.mxu0
      %575 = vmatprep.mubr.f32.mxu0 0.0
      %576 = vmatmul.mubr.f32.gmra.mxu0 %v501
      %v577 = vpop.f32.mrf.mxu0
      %v578 = vadd.f32 0.0, %v577
      %v579 = vpop.f32.mrf.mxu0
      %580 = vdwg.mxu0
      %v581 = vadd.f32 %v483, %v573
      %v582 = vadd.f32 %v488, %v578
      %s583 = sadd.s32 %s309, 9
      %s584 = scalar_lea.vmem [#allocation2], %s583
      %v585 = vld [vmem:[%s584] sm:$0xff]
      %v586 = vld [vmem:[%s584 + $0x8] sm:$0xff]
      %s587 = scalar_lea.vmem %s1, 12
      %v588 = vld [vmem:[%s587] sm:$0xf]
      %v590 = vsel %vm321, %v585, 0
      %v593 = vsel %vm321, %v586, 0
      %v596 = vsel %vm328, %v588, 0
      %598 = vmatprep.subr.mxu0 0.0
      %599 = vmatpush1.msra.mxu0 0.0
      %600 = vmatprep.subr.mxu0 0.0
      %601 = vmatpush1.msra.mxu0 0.0
      %602 = vmatprep.subr.mxu0 0.0
      %603 = vmatpush1.msra.mxu0 0.0
      %604 = vmatprep.subr.mxu0 0.0
      %605 = vmatpush1.msra.mxu0 0.0
      %606 = vmatprep.subr.mxu0 0.0
      %607 = vmatpush1.msra.mxu0 0.0
      %608 = vmatprep.subr.mxu0 0.0
      %609 = vmatpush1.msra.mxu0 0.0
      %610 = vmatprep.subr.mxu0 0.0
      %611 = vmatpush1.msra.mxu0 0.0
      %612 = vmatprep.subr.mxu0 0.0
      %613 = vmatpush1.msra.mxu0 0.0
      %614 = vmatprep.subr.mxu0 0.0
      %615 = vmatpush1.msra.mxu0 0.0
      %616 = vmatprep.subr.mxu0 0.0
      %617 = vmatpush1.msra.mxu0 0.0
      %618 = vmatprep.subr.mxu0 0.0
      %619 = vmatpush1.msra.mxu0 0.0
      %620 = vmatprep.subr.mxu0 0.0
      %621 = vmatpush1.msra.mxu0 0.0
      %622 = vmatprep.subr.mxu0 0.0
      %623 = vmatpush1.msra.mxu0 0.0
      %624 = vmatprep.subr.mxu0 0.0
      %625 = vmatpush1.msra.mxu0 0.0
      %626 = vmatprep.subr.mxu0 0.0
      %627 = vmatpush1.msra.mxu0 0.0
      %628 = vmatprep.subr.mxu0 0.0
      %629 = vmatpush1.msra.mxu0 %v596
      %630 = vmatprep.subr.mxu0 0.0
      %631 = vmatpush2.msra.mxu0 0.0
      %632 = vmatprep.subr.mxu0 0.0
      %633 = vmatpush2.msra.mxu0 0.0
      %634 = vmatprep.subr.mxu0 0.0
      %635 = vmatpush2.msra.mxu0 0.0
      %636 = vmatprep.subr.mxu0 0.0
      %637 = vmatpush2.msra.mxu0 0.0
      %638 = vmatprep.subr.mxu0 0.0
      %639 = vmatpush2.msra.mxu0 0.0
      %640 = vmatprep.subr.mxu0 0.0
      %641 = vmatpush2.msra.mxu0 0.0
      %642 = vmatprep.subr.mxu0 0.0
      %643 = vmatpush2.msra.mxu0 0.0
      %644 = vmatprep.subr.mxu0 0.0
      %645 = vmatpush2.msra.mxu0 0.0
      %646 = vmatprep.subr.mxu0 0.0
      %647 = vmatpush2.msra.mxu0 0.0
      %648 = vmatprep.subr.mxu0 0.0
      %649 = vmatpush2.msra.mxu0 0.0
      %650 = vmatprep.subr.mxu0 0.0
      %651 = vmatpush2.msra.mxu0 0.0
      %652 = vmatprep.subr.mxu0 0.0
      %653 = vmatpush2.msra.mxu0 0.0
      %654 = vmatprep.subr.mxu0 0.0
      %655 = vmatpush2.msra.mxu0 0.0
      %656 = vmatprep.subr.mxu0 0.0
      %657 = vmatpush2.msra.mxu0 0.0
      %658 = vmatprep.subr.mxu0 0.0
      %659 = vmatpush2.msra.mxu0 0.0
      %660 = vmatprep.subr.mxu0 0.0
      %661 = vmatpush2.msra.mxu0 0.0
      %662 = vmatprep.mubr.f32.mxu0 0.0
      %663 = vmatmul.mubr.f32.gmra.mxu0 %v590
      %v664 = vpop.f32.mrf.mxu0
      %v665 = vadd.f32 0.0, %v664
      %v666 = vpop.f32.mrf.mxu0
      %667 = vmatprep.mubr.f32.mxu0 0.0
      %668 = vmatmul.mubr.f32.gmra.mxu0 %v593
      %v669 = vpop.f32.mrf.mxu0
      %v670 = vadd.f32 0.0, %v669
      %v671 = vpop.f32.mrf.mxu0
      %672 = vdwg.mxu0
      %v673 = vadd.f32 %v581, %v665
      %v674 = vadd.f32 %v582, %v670
      %s675 = sadd.s32 %s309, 10
      %s676 = scalar_lea.vmem [#allocation2], %s675
      %v677 = vld [vmem:[%s676] sm:$0xff]
      %v678 = vld [vmem:[%s676 + $0x8] sm:$0xff]
      %s679 = scalar_lea.vmem %s1, 16
      %v680 = vld [vmem:[%s679] sm:$0xf]
      %v682 = vsel %vm321, %v677, 0
      %v685 = vsel %vm321, %v678, 0
      %v688 = vsel %vm328, %v680, 0
      %690 = vmatprep.subr.mxu0 0.0
      %691 = vmatpush1.msra.mxu0 0.0
      %692 = vmatprep.subr.mxu0 0.0
      %693 = vmatpush1.msra.mxu0 0.0
      %694 = vmatprep.subr.mxu0 0.0
      %695 = vmatpush1.msra.mxu0 0.0
      %696 = vmatprep.subr.mxu0 0.0
      %697 = vmatpush1.msra.mxu0 0.0
      %698 = vmatprep.subr.mxu0 0.0
      %699 = vmatpush1.msra.mxu0 0.0
      %700 = vmatprep.subr.mxu0 0.0
      %701 = vmatpush1.msra.mxu0 0.0
      %702 = vmatprep.subr.mxu0 0.0
      %703 = vmatpush1.msra.mxu0 0.0
      %704 = vmatprep.subr.mxu0 0.0
      %705 = vmatpush1.msra.mxu0 0.0
      %706 = vmatprep.subr.mxu0 0.0
      %707 = vmatpush1.msra.mxu0 0.0
      %708 = vmatprep.subr.mxu0 0.0
      %709 = vmatpush1.msra.mxu0 0.0
      %710 = vmatprep.subr.mxu0 0.0
      %711 = vmatpush1.msra.mxu0 0.0
      %712 = vmatprep.subr.mxu0 0.0
      %713 = vmatpush1.msra.mxu0 0.0
      %714 = vmatprep.subr.mxu0 0.0
      %715 = vmatpush1.msra.mxu0 0.0
      %716 = vmatprep.subr.mxu0 0.0
      %717 = vmatpush1.msra.mxu0 0.0
      %718 = vmatprep.subr.mxu0 0.0
      %719 = vmatpush1.msra.mxu0 0.0
      %720 = vmatprep.subr.mxu0 0.0
      %721 = vmatpush1.msra.mxu0 %v688
      %722 = vmatprep.subr.mxu0 0.0
      %723 = vmatpush2.msra.mxu0 0.0
      %724 = vmatprep.subr.mxu0 0.0
      %725 = vmatpush2.msra.mxu0 0.0
      %726 = vmatprep.subr.mxu0 0.0
      %727 = vmatpush2.msra.mxu0 0.0
      %728 = vmatprep.subr.mxu0 0.0
      %729 = vmatpush2.msra.mxu0 0.0
      %730 = vmatprep.subr.mxu0 0.0
      %731 = vmatpush2.msra.mxu0 0.0
      %732 = vmatprep.subr.mxu0 0.0
      %733 = vmatpush2.msra.mxu0 0.0
      %734 = vmatprep.subr.mxu0 0.0
      %735 = vmatpush2.msra.mxu0 0.0
      %736 = vmatprep.subr.mxu0 0.0
      %737 = vmatpush2.msra.mxu0 0.0
      %738 = vmatprep.subr.mxu0 0.0
      %739 = vmatpush2.msra.mxu0 0.0
      %740 = vmatprep.subr.mxu0 0.0
      %741 = vmatpush2.msra.mxu0 0.0
      %742 = vmatprep.subr.mxu0 0.0
      %743 = vmatpush2.msra.mxu0 0.0
      %744 = vmatprep.subr.mxu0 0.0
      %745 = vmatpush2.msra.mxu0 0.0
      %746 = vmatprep.subr.mxu0 0.0
      %747 = vmatpush2.msra.mxu0 0.0
      %748 = vmatprep.subr.mxu0 0.0
      %749 = vmatpush2.msra.mxu0 0.0
      %750 = vmatprep.subr.mxu0 0.0
      %751 = vmatpush2.msra.mxu0 0.0
      %752 = vmatprep.subr.mxu0 0.0
      %753 = vmatpush2.msra.mxu0 0.0
      %754 = vmatprep.mubr.f32.mxu0 0.0
      %755 = vmatmul.mubr.f32.gmra.mxu0 %v682
      %v756 = vpop.f32.mrf.mxu0
      %v757 = vadd.f32 0.0, %v756
      %v758 = vpop.f32.mrf.mxu0
      %759 = vmatprep.mubr.f32.mxu0 0.0
      %760 = vmatmul.mubr.f32.gmra.mxu0 %v685
      %v761 = vpop.f32.mrf.mxu0
      %v762 = vadd.f32 0.0, %v761
      %v763 = vpop.f32.mrf.mxu0
      %764 = vdwg.mxu0
      %v765 = vadd.f32 %v673, %v757
      %v766 = vadd.f32 %v674, %v762
      %v767 = vld [vmem:[%s2] sm:$0x1]
      %v769 = vlaneseq
      %v770 = vshrl.u32 %v769, 7
      %v771 = vsub.s32 0, %v770
      %v772 = vrot.slane %v767, %v771
      %v774 = vadd.f32 %v765, %v772
      %v775 = vadd.f32 %v766, %v772
      %vm776 = vcmask 64512
      %777 = vst.msk [vmem:[%s273] sm:$0xff] %vm776, %v774
      %778 = vst.msk [vmem:[%s273 + $0x8] sm:$0xff] %vm776, %v775
      %781 = vrot.lane.b32.xlu0 %v774, 120
      %v782 = vpop.permute.xlu0 %781
      %783 = vrot.lane.b32.xlu0 %v775, 120
      %v784 = vpop.permute.xlu0 %783
      %787 = vst.msk [vmem:[%s283] sm:$0xff] %vm321, %v782
      %788 = vst.msk [vmem:[%s283 + $0x8] sm:$0xff] %vm321, %v784
      %789 = vrot.lane.b32.xlu0 %v774, 116
      %v790 = vpop.permute.xlu0 %789
      %791 = vrot.lane.b32.xlu0 %v775, 116
      %v792 = vpop.permute.xlu0 %791
      %795 = vst.msk [vmem:[%s293] sm:$0xff] %vm321, %v790
      %796 = vst.msk [vmem:[%s293 + $0x8] sm:$0xff] %vm321, %v792
      %s797 = smul.u32 2, %s22
      %p798 = scmp.lt.s32.totalorder %s21, 1
      %s799 = scalar_select %p798, %s21, 1
      %p800 = scmp.lt.s32.totalorder %s797, 1
      %s801 = scalar_select %p800, %s797, 1
      %s802 = smul.addr %s799, 2
      %s803 = sadd.s32 %s801, %s802
      %s804 = smul.addr %s803, 8
      %s805 = scalar_lea.vmem %s3, %s804
      %s806 = smul.u32 2, %s22
      %p807 = scmp.lt.s32.totalorder %s21, 1
      %s808 = scalar_select %p807, %s21, 1
      %p809 = scmp.lt.s32.totalorder %s806, 1
      %s810 = scalar_select %p809, %s806, 1
      %s811 = smul.addr %s808, 2
      %s812 = sadd.s32 %s810, %s811
      %s813 = smul.addr %s812, 8
      %s814 = scalar_lea.vmem %s4, %s813
      %s815 = smul.u32 2, %s22
      %p816 = scmp.lt.s32.totalorder %s21, 1
      %s817 = scalar_select %p816, %s21, 1
      %p818 = scmp.lt.s32.totalorder %s815, 1
      %s819 = scalar_select %p818, %s815, 1
      %s820 = smul.addr %s817, 2
      %s821 = sadd.s32 %s819, %s820
      %s822 = smul.addr %s821, 8
      %s823 = scalar_lea.vmem %s5, %s822
      // Predicated region
      $region37: #{tpu_custom_call.1} parent=31 // pred_check
        %p824 = pneg %p117
      $region38: #{tpu_custom_call.1} parent=31 // pred_check_branch
        %826 = sbr.rel (%p824) target = $region40
      $region39: #{tpu_custom_call.1} parent=31 // pred_region
        %s827 = smul.u32 2, %s22
      $region40: #{tpu_custom_call.1} parent=31 // pred_fallthru
        _
      // Predicated region
      $region41: #{tpu_custom_call.1} parent=31 // pred_check
        %p828 = pneg %p145
      $region42: #{tpu_custom_call.1} parent=31 // pred_check_branch
        %830 = sbr.rel (%p828) target = $region44
      $region43: #{tpu_custom_call.1} parent=31 // pred_region
        %s831 = smul.u32 2, %s22
      $region44: #{tpu_custom_call.1} parent=31 // pred_fallthru
        _
      // Predicated region
      $region45: #{tpu_custom_call.1} parent=31 // pred_check
        %p832 = pneg %p173
      $region46: #{tpu_custom_call.1} parent=31 // pred_check_branch
        %834 = sbr.rel (%p832) target = $region48
      $region47: #{tpu_custom_call.1} parent=31 // pred_region
        %s835 = smul.u32 2, %s22
      $region48: #{tpu_custom_call.1} parent=31 // pred_fallthru
        _
    $region32: #{tpu_custom_call.1} parent=5 // pred_fallthru
      _
    %p836 = scmp.le.s32.totalorder 2, %s12
    // Predicated region
    $region49: #{tpu_custom_call.1} parent=5 // pred_check
      %p837 = pneg %p836
    $region50: #{tpu_custom_call.1} parent=5 // pred_check_branch
      %839 = sbr.rel (%p837) target = $region52
    $region51: #{tpu_custom_call.1} parent=5 // pred_region
      %s840 = ssub.s32 %s12, 2
      // Predicated region
      $region53: #{tpu_custom_call.1} parent=51 // pred_check
        %p841 = pneg %p123
      $region54: #{tpu_custom_call.1} parent=51 // pred_check_branch
        %843 = sbr.rel (%p841) target = $region56
      $region55: #{tpu_custom_call.1} parent=51 // pred_region
        %s844 = smul.u32 2, %s24
        %p845 = scmp.lt.s32.totalorder %s23, 1
        %s846 = scalar_select %p845, %s23, 1
        %p847 = scmp.lt.s32.totalorder %s844, 1
        %s848 = scalar_select %p847, %s844, 1
        %s849 = smul.addr %s846, 2
        %s850 = sadd.s32 %s848, %s849
        %s851 = smul.addr %s850, 8
        %s852 = scalar_lea.vmem %s3, %s851
      $region56: #{tpu_custom_call.1} parent=51 // pred_fallthru
        _
      // Predicated region
      $region57: #{tpu_custom_call.1} parent=51 // pred_check
        %p853 = pneg %p151
      $region58: #{tpu_custom_call.1} parent=51 // pred_check_branch
        %855 = sbr.rel (%p853) target = $region60
      $region59: #{tpu_custom_call.1} parent=51 // pred_region
        %s856 = smul.u32 2, %s24
        %p857 = scmp.lt.s32.totalorder %s23, 1
        %s858 = scalar_select %p857, %s23, 1
        %p859 = scmp.lt.s32.totalorder %s856, 1
        %s860 = scalar_select %p859, %s856, 1
        %s861 = smul.addr %s858, 2
        %s862 = sadd.s32 %s860, %s861
        %s863 = smul.addr %s862, 8
        %s864 = scalar_lea.vmem %s4, %s863
      $region60: #{tpu_custom_call.1} parent=51 // pred_fallthru
        _
      // Predicated region
      $region61: #{tpu_custom_call.1} parent=51 // pred_check
        %p865 = pneg %p179
      $region62: #{tpu_custom_call.1} parent=51 // pred_check_branch
        %867 = sbr.rel (%p865) target = $region64
      $region63: #{tpu_custom_call.1} parent=51 // pred_region
        %s868 = smul.u32 2, %s24
        %p869 = scmp.lt.s32.totalorder %s23, 1
        %s870 = scalar_select %p869, %s23, 1
        %p871 = scmp.lt.s32.totalorder %s868, 1
        %s872 = scalar_select %p871, %s868, 1
        %s873 = smul.addr %s870, 2
        %s874 = sadd.s32 %s872, %s873
        %s875 = smul.addr %s874, 8
        %s876 = scalar_lea.vmem %s5, %s875
      $region64: #{tpu_custom_call.1} parent=51 // pred_fallthru
        _
    $region52: #{tpu_custom_call.1} parent=5 // pred_fallthru
      _
  $region6: #{tpu_custom_call.1} parent=0 // loop_footer
    %s16 = sadd.s32 1, %s12
  $region7: #{tpu_custom_call.1} parent=0 // loop_footer_branch
    %11 = sbr.rel target = $region3
  $region8: #{tpu_custom_call.1} parent=0 // loop_exit
    _

</llo_original>
